<compile_context>
chip_gen: v7x
topology: tpu7x:2x2x1
jax: 0.10.0
libtpu: 0.0.40
codegen_flags: <defaults>
</compile_context>

<pallas_src>
import functools

import jax
import jax.numpy as jnp
from jax import lax
from jax.experimental import pallas as pl
from jax.experimental.pallas import tpu as pltpu

P_NORM = 10            # default p from the module's __init__
LANES = 128
TILE_ROWS_MAX = 4096   # (4096, 128) f32 = 2 MiB per input block


def _int_pow(x, p):
    """x**p for a static Python int p >= 1 via repeated multiply (VPU only)."""
    acc = None
    base = x
    while p:
        if p & 1:
            acc = base if acc is None else acc * base
        p >>= 1
        if p:
            base = base * base
    return acc


def _lp_partial_kernel(x_ref, y_ref, out_ref, *, p, tile_rows, inner, valid_rows):
    oi = pl.program_id(0)   # "parallel" partial-sum index
    j = pl.program_id(1)    # sequential reduction index

    @pl.when(j == 0)
    def _():
        out_ref[...] = jnp.zeros_like(out_ref)

    d = x_ref[...].astype(jnp.float32) - y_ref[...].astype(jnp.float32)
    if p % 2 == 1:
        d = jnp.abs(d)                      # even p: |d|**p == d**p, abs redundant
    if valid_rows is not None:
        # Mask out-of-bounds rows of the ragged last tile (OOB DMA contents
        # are undefined; discard them before the power/accumulate).
        row0 = (oi * inner + j) * tile_rows
        rows = row0 + lax.broadcasted_iota(jnp.int32, d.shape, 0)
        d = jnp.where(rows < valid_rows, d, 0.0)

    pw = _int_pow(d, p)                     # |diff|**p, pure VPU multiplies
    # (tile_rows, 128) -> (tile_rows//8, 8, 128); summing the leading dim is
    # vreg-aligned VPU adds only (no cross-lane XLU work in the hot loop).
    part = jnp.sum(pw.reshape(tile_rows // 8, 8, LANES), axis=0)
    out_ref[...] += part[None, :, :]


def lp_loss(x, y, p=P_NORM):
    assert x.shape == y.shape, "input/target must match shapes"
    assert isinstance(p, int) and p >= 1, "p must be a static positive int"

    n = x.size
    xf = x.reshape(-1)
    yf = y.reshape(-1)

    # Common path: numel is a multiple of 8*128, reshape is a free bitcast and
    # the inputs are streamed through HBM exactly once.  Otherwise pad with
    # zeros (|0-0|**p contributes 0) — a single small copy, rare in practice.
    chunk = 8 * LANES
    pad = (-n) % chunk
    if pad:
        xf = jnp.pad(xf, (0, pad))
        yf = jnp.pad(yf, (0, pad))

    rows = (n + pad) // LANES           # multiple of 8
    x2 = xf.reshape(rows, LANES)
    y2 = yf.reshape(rows, LANES)

    tile_rows = min(TILE_ROWS_MAX, rows)        # always a multiple of 8
    num_tiles = pl.cdiv(rows, tile_rows)

    # 2-way split across an outer "parallel" axis when it divides evenly
    # (lets a v7x megacore use both TensorCores); otherwise a single stream.
    n_split = 2 if (num_tiles >= 2 and num_tiles % 2 == 0) else 1
    inner = num_tiles // n_split

    # Only mask when the last tile is ragged (static decision).
    valid_rows = rows if rows % tile_rows != 0 else None

    kernel = functools.partial(
        _lp_partial_kernel, p=p, tile_rows=tile_rows, inner=inner,
        valid_rows=valid_rows)

    partials = pl.pallas_call(
        kernel,
        out_shape=jax.ShapeDtypeStruct((n_split, 8, LANES), jnp.float32),
        grid_spec=pltpu.PrefetchScalarGridSpec(
            num_scalar_prefetch=0,
            grid=(n_split, inner),
            in_specs=[
                pl.BlockSpec((tile_rows, LANES), lambda oi, j: (oi * inner + j, 0)),
                pl.BlockSpec((tile_rows, LANES), lambda oi, j: (oi * inner + j, 0)),
            ],
            out_specs=pl.BlockSpec((1, 8, LANES), lambda oi, j: (oi, 0, 0)),
        ),
        compiler_params=pltpu.CompilerParams(
            dimension_semantics=("parallel", "arbitrary"),
            # ~8 MiB of double-buffered input blocks; 32 MiB scope is safe on
            # v5e/v6e (128 MiB physical) and v7x (64 MiB physical).
            vmem_limit_bytes=32 * 1024 * 1024,
        ),
    )(x2, y2)

    total = jnp.sum(partials)                      # tiny final reduction
    result = total ** (1.0 / p)
    return result.astype(jnp.promote_types(x.dtype, y.dtype))


if __name__ == "__main__":
    key = jax.random.PRNGKey(0)
    k1, k2 = jax.random.split(key)
    # small shapes consistent with a latent feature map: N=2, C=4, H=W=16 (NCHW)
    x = jax.random.normal(k1, (2, 4, 16, 16), dtype=jnp.float32)
    y = jax.random.normal(k2, (2, 4, 16, 16), dtype=jnp.float32)

    loss = lp_loss(x, y, p=P_NORM)
    jax.block_until_ready(loss)

    # reference check in plain JAX (tolerance allows different accumulation order)
    ref = jnp.sum(jnp.abs(x - y) ** P_NORM) ** (1.0 / P_NORM)
    assert jnp.allclose(loss, ref, rtol=1e-4, atol=1e-6), (loss, ref)

    print("KERNEL_OK")
</pallas_src>

<mosaic_0001>
module attributes {stable_mosaic.version = 11 : i64} {
  func.func @_lp_partial_kernel(%arg0: i32, %arg1: i32, %arg2: memref<16x128xf32, #tpu.memory_space<vmem>>, %arg3: memref<16x128xf32, #tpu.memory_space<vmem>>, %arg4: memref<1x8x128xf32, #tpu.memory_space<vmem>>) attributes {dimension_semantics = [#tpu.dimension_semantics<parallel>, #tpu.dimension_semantics<arbitrary>], iteration_bounds = array<i64: 1, 1>, scalar_prefetch = 0 : i64, scratch_operands = 0 : i64, tpu.core_type = #tpu.core_type<tc>, window_params = [{transform_indices = @transform_0, window_bounds = array<i64: 16, 128>}, {transform_indices = @transform_1, window_bounds = array<i64: 16, 128>}, {transform_indices = @transform_2, window_bounds = array<i64: 1, 8, 128>}]} {
    %c0_i32 = arith.constant 0 : i32
    %0 = arith.cmpi eq, %arg1, %c0_i32 : i32
    %1 = arith.extui %0 : i1 to i32
    %c0_i32_0 = arith.constant 0 : i32
    %2 = arith.cmpi ne, %1, %c0_i32_0 : i32
    scf.if %2 {
      %cst_10 = arith.constant 0.000000e+00 : f32
      %16 = vector.broadcast %cst_10 : f32 to vector<1x8x128xf32>
      %c0_11 = arith.constant 0 : index
      %c0_12 = arith.constant 0 : index
      %c0_13 = arith.constant 0 : index
      %17 = vector.load %arg4[%c0_11, %c0_12, %c0_13] : memref<1x8x128xf32, #tpu.memory_space<vmem>>, vector<1x8x128xf32>
      tpu.vector_store %arg4[%c0_11, %c0_12, %c0_13], %16 {strides = array<i32>} : memref<1x8x128xf32, #tpu.memory_space<vmem>>, vector<1x8x128xf32>,
    } else {
    }
    %c0 = arith.constant 0 : index
    %c0_1 = arith.constant 0 : index
    %3 = vector.load %arg2[%c0, %c0_1] : memref<16x128xf32, #tpu.memory_space<vmem>>, vector<16x128xf32>
    %c0_2 = arith.constant 0 : index
    %c0_3 = arith.constant 0 : index
    %4 = vector.load %arg3[%c0_2, %c0_3] : memref<16x128xf32, #tpu.memory_space<vmem>>, vector<16x128xf32>
    %5 = arith.subf %3, %4 : vector<16x128xf32>
    %6 = arith.mulf %5, %5 : vector<16x128xf32>
    %7 = arith.mulf %6, %6 : vector<16x128xf32>
    %8 = arith.mulf %7, %7 : vector<16x128xf32>
    %9 = arith.mulf %6, %8 : vector<16x128xf32>
    %10 = vector.shape_cast %9 : vector<16x128xf32> to vector<2x8x128xf32>
    %cst = arith.constant dense<0.000000e+00> : vector<8x128xf32>
    %11 = vector.multi_reduction <add>, %10, %cst [0] : vector<2x8x128xf32> to vector<8x128xf32>
    %c0_4 = arith.constant 0 : index
    %c0_5 = arith.constant 0 : index
    %c0_6 = arith.constant 0 : index
    %12 = vector.load %arg4[%c0_4, %c0_5, %c0_6] : memref<1x8x128xf32, #tpu.memory_space<vmem>>, vector<1x8x128xf32>
    %13 = vector.shape_cast %11 : vector<8x128xf32> to vector<1x8x128xf32>
    %14 = arith.addf %12, %13 : vector<1x8x128xf32>
    %c0_7 = arith.constant 0 : index
    %c0_8 = arith.constant 0 : index
    %c0_9 = arith.constant 0 : index
    %15 = vector.load %arg4[%c0_7, %c0_8, %c0_9] : memref<1x8x128xf32, #tpu.memory_space<vmem>>, vector<1x8x128xf32>
    tpu.vector_store %arg4[%c0_7, %c0_8, %c0_9], %14 {strides = array<i32>} : memref<1x8x128xf32, #tpu.memory_space<vmem>>, vector<1x8x128xf32>,
    return
  }
  func.func @transform_0(%arg0: i32, %arg1: i32) -> (i32, i32) {
    %c1_i32 = arith.constant 1 : i32
    %0 = arith.muli %arg0, %c1_i32 : i32
    %1 = arith.addi %0, %arg1 : i32
    %c0_i32 = arith.constant 0 : i32
    %c0_i32_0 = arith.constant 0 : i32
    return %1, %c0_i32 : i32, i32
  }
  func.func @transform_1(%arg0: i32, %arg1: i32) -> (i32, i32) {
    %c1_i32 = arith.constant 1 : i32
    %0 = arith.muli %arg0, %c1_i32 : i32
    %1 = arith.addi %0, %arg1 : i32
    %c0_i32 = arith.constant 0 : i32
    %c0_i32_0 = arith.constant 0 : i32
    return %1, %c0_i32 : i32, i32
  }
  func.func @transform_2(%arg0: i32, %arg1: i32) -> (i32, i32, i32) {
    %c0_i32 = arith.constant 0 : i32
    %c0_i32_0 = arith.constant 0 : i32
    %c0_i32_1 = arith.constant 0 : i32
    return %arg0, %c0_i32, %c0_i32_0 : i32, i32, i32
  }
}

</mosaic_0001>

<llo_original>
// kernel: tpu_custom_call.1
$region0: #{tpu_custom_call.1}
  #allocation0 [shape = 'u32[]', space=smem, size = 0x4, offset = 0x4, fixed_abs, tag = 'smem constant byte address 0x4 - core index']
  #allocation1 [shape = 'u32[144,128]{1,0:T(1,128)}', space=vmem, size = 0x12000, scoped, tag = 'internal scratch']
  %s0 = inlined_call_operand.hbm [shape: f32[16,128], index: 0, kind: input, shape index: {}]
  %s1 = inlined_call_operand.hbm [shape: f32[16,128], index: 1, kind: input, shape index: {}]
  %s2 = inlined_call_operand.hbm [shape: f32[1,8,128], index: 2, kind: output, shape index: {}]
  %s3 = sld [smem:[#allocation0]]
  $region30: #{tpu_custom_call.1} parent=0
    _
  %s5 = ssub.s32 1, %s3
  %s6 = scalar_select 0, %s5, %s3
  $region1: #{tpu_custom_call.1} parent=0
    #allocation2 [shape = 'u8[8192]{0}', space=vmem, size = 0x2000, scoped, tag = 'input window, operand 0, single buffered']
    #allocation3 [shape = 's32[1]{0}', space=sflag, size = 0x4, scoped, tag = 'scoped memory for tpu_custom_call.1']
    #allocation4 [shape = 's32[1]{0}', space=sflag, size = 0x4, scoped, tag = 'scoped memory for tpu_custom_call.1']
    #allocation5 [shape = 'u8[8192]{0}', space=vmem, size = 0x2000, scoped, tag = 'input window, operand 1, single buffered']
    #allocation6 [shape = 's32[1]{0}', space=sflag, size = 0x4, scoped, tag = 'scoped memory for tpu_custom_call.1']
    #allocation7 [shape = 'u8[4096]{0}', space=vmem, size = 0x1000, scoped, tag = 'output window, operand 0, single buffered']
    %7 = vsyncpa [#allocation3], 0
    %8 = vsyncpa [#allocation6], 0
    %9 = vsyncpa [#allocation4], 0
    // Predicated region
    $region2: #{tpu_custom_call.1} parent=1 // pred_check
      _
    $region3: #{tpu_custom_call.1} parent=1 // pred_check_branch
      %11 = sbr.rel (0) target = $region5
    $region4: #{tpu_custom_call.1} parent=1 // pred_region
      %s12 = sadd.s32 0, 0
      %s13 = smul.u32 2, %s12
      %s15 = ssub.s32 256, 256
      %16 = vsyncadd [#allocation3], %s15
      %s17 = smul.addr %s13, 128
      %s18 = scalar_lea.hbm %s0, %s17
      %s19 = sshll.u32 [#allocation2], 4
      %s20 = int_to_ptr.vmem [resolvable:$true] %s19
      %25 = dma.hbm_to_vmem [thread:$0]  %s18, 256, %s20, [#allocation3], 128, 128, 8
    $region5: #{tpu_custom_call.1} parent=1 // pred_fallthru
      _
    // Predicated region
    $region6: #{tpu_custom_call.1} parent=1 // pred_check
      _
    $region7: #{tpu_custom_call.1} parent=1 // pred_check_branch
      %27 = sbr.rel (0) target = $region9
    $region8: #{tpu_custom_call.1} parent=1 // pred_region
      %s28 = sadd.s32 0, 0
      %s29 = smul.u32 2, %s28
      %s31 = ssub.s32 256, 256
      %32 = vsyncadd [#allocation6], %s31
      %s33 = smul.addr %s29, 128
      %s34 = scalar_lea.hbm %s1, %s33
      %s35 = sshll.u32 [#allocation5], 4
      %s36 = int_to_ptr.vmem [resolvable:$true] %s35
      %41 = dma.hbm_to_vmem [thread:$0]  %s34, 256, %s36, [#allocation6], 128, 128, 8
    $region9: #{tpu_custom_call.1} parent=1 // pred_fallthru
      _
    // Predicated region
    $region10: #{tpu_custom_call.1} parent=1 // pred_check
      _
    $region11: #{tpu_custom_call.1} parent=1 // pred_check_branch
      %43 = sbr.rel (0) target = $region13
    $region12: #{tpu_custom_call.1} parent=1 // pred_region
      %44 = dma.done [#allocation3], 256
    $region13: #{tpu_custom_call.1} parent=1 // pred_fallthru
      _
    // Predicated region
    $region14: #{tpu_custom_call.1} parent=1 // pred_check
      _
    $region15: #{tpu_custom_call.1} parent=1 // pred_check_branch
      %46 = sbr.rel (0) target = $region17
    $region16: #{tpu_custom_call.1} parent=1 // pred_region
      %47 = dma.done [#allocation6], 256
    $region17: #{tpu_custom_call.1} parent=1 // pred_fallthru
      _
    %s48 = sadd.s32 0, 0
    %s49 = smul.u32 2, %s48
    %s50 = sadd.s32 0, 0
    %s51 = smul.u32 2, %s50
    %p52 = scmp.eq.s32.totalorder 0, 0
    // Predicated region
    $region18: #{tpu_custom_call.1} parent=1 // pred_check
      %p53 = pneg %p52
    $region19: #{tpu_custom_call.1} parent=1 // pred_check_branch
      %55 = sbr.rel (%p53) target = $region21
    $region20: #{tpu_custom_call.1} parent=1 // pred_region
      %56 = vst [vmem:[#allocation7] sm:$0xff] 0.0
    $region21: #{tpu_custom_call.1} parent=1 // pred_fallthru
      _
    %v57 = vld [vmem:[#allocation2] sm:$0xff]
    %v58 = vld [vmem:[#allocation2 + $0x8] sm:$0xff]
    %v59 = vld [vmem:[#allocation5] sm:$0xff]
    %v60 = vld [vmem:[#allocation5 + $0x8] sm:$0xff]
    %v61 = vsub.f32 %v57, %v59
    %v62 = vsub.f32 %v58, %v60
    %v63 = vmul.f32 %v61, %v61
    %v64 = vmul.f32 %v62, %v62
    %v65 = vmul.f32 %v63, %v63
    %v66 = vmul.f32 %v64, %v64
    %v67 = vmul.f32 %v65, %v65
    %v68 = vmul.f32 %v66, %v66
    %v69 = vmul.f32 %v63, %v67
    %v70 = vmul.f32 %v64, %v68
    %v71 = vadd.f32 %v69, %v70
    %v72 = vld [vmem:[#allocation7] sm:$0xff]
    %v73 = vadd.f32 %v72, %v71
    %74 = vst [vmem:[#allocation7] sm:$0xff] %v73
    // Predicated region
    $region22: #{tpu_custom_call.1} parent=1 // pred_check
      _
    $region23: #{tpu_custom_call.1} parent=1 // pred_check_branch
      %76 = sbr.rel (0) target = $region25
    $region24: #{tpu_custom_call.1} parent=1 // pred_region
      %s78 = ssub.s32 128, 128
      %79 = vsyncadd [#allocation4], %s78
      %s81 = sshll.u32 [#allocation7], 4
      %s82 = int_to_ptr.vmem [resolvable:$true] %s81
      %84 = dma.vmem_to_hbm [thread:$0]  %s82, 128, %s2, [#allocation4]
    $region25: #{tpu_custom_call.1} parent=1 // pred_fallthru
      _
    // Predicated region
    $region26: #{tpu_custom_call.1} parent=1 // pred_check
      _
    $region27: #{tpu_custom_call.1} parent=1 // pred_check_branch
      %86 = sbr.rel (0) target = $region29
    $region28: #{tpu_custom_call.1} parent=1 // pred_region
      %87 = dma.done [#allocation4], 128
    $region29: #{tpu_custom_call.1} parent=1 // pred_fallthru
      _
    %88 = vsyncpa [#allocation3], 1
    %89 = vsyncpa [#allocation6], 1
    %90 = vsyncpa [#allocation4], 1

</llo_original>
